<compile_context>
chip_gen: v7x
topology: tpu7x:2x2x1
jax: 0.10.0
libtpu: 0.0.40
codegen_flags: <defaults>
</compile_context>

<pallas_src>
import functools

import jax
import jax.numpy as jnp
from jax import lax
from jax.experimental import pallas as pl
from jax.experimental.pallas import tpu as pltpu


def _down_kernel(xe_ref, xeh_ref, xo_ref, xoh_ref, w_ref, b_ref, o_ref,
                 *, tile_oh, w_out):
    """Blocks:
      xe_ref : (2*tile_oh, We, C)  bf16  even padded columns, main row window
      xeh_ref: (1,         We, C)  bf16  even padded columns, halo row (bottom)
      xo_ref : (2*tile_oh, Wo, C)  bf16  odd  padded columns, main row window
      xoh_ref: (1,         Wo, C)  bf16  odd  padded columns, halo row (bottom)
      w_ref  : (9*C, C_out)        bf16  HWIO-ordered, BN scale folded in
      b_ref  : (1, C_out)          f32   folded BN bias
      o_ref  : (tile_oh, W_out, C_out)
    """
    xe = xe_ref[...]                       # (2T, We, C)
    xo = xo_ref[...]                       # (2T, Wo, C)
    xeh = xeh_ref[...]                     # (1, We, C)
    xoh = xoh_ref[...]                     # (1, Wo, C)

    two_t, we, c = xe.shape
    wo = xo.shape[1]
    t = tile_oh

    # Row-parity planes: output row `oh` needs padded rows 2*oh, 2*oh+1, 2*oh+2
    # (relative to the window start).  Splitting the leading axis is layout-free.
    xe_r = xe.reshape(t, 2, we, c)
    xo_r = xo.reshape(t, 2, wo, c)
    if t > 1:
        pe2 = jnp.concatenate([xe_r[1:, 0], xeh], axis=0)   # rows 2,4,...,2T
        po2 = jnp.concatenate([xo_r[1:, 0], xoh], axis=0)
    else:
        pe2, po2 = xeh, xoh
    planes_e = (xe_r[:, 0], xe_r[:, 1], pe2)                 # dh = 0, 1, 2
    planes_o = (xo_r[:, 0], xo_r[:, 1], po2)

    # im2col: 9 contiguous tap slices, concatenated along lanes (tap order = dh-major,
    # dw-minor, matching the HWIO -> (9*C, C_out) weight reshape).
    patches = []
    for dh in range(3):
        pe, po = planes_e[dh], planes_o[dh]
        patches.append(pe[:, 0:w_out, :])         # dw = 0  -> padded col 2*ow
        patches.append(po[:, 0:w_out, :])         # dw = 1  -> padded col 2*ow + 1
        patches.append(pe[:, 1:w_out + 1, :])     # dw = 2  -> padded col 2*ow + 2
    im2col = jnp.concatenate(patches, axis=-1)    # (T, W_out, 9*C) bf16
    lhs = im2col.reshape(t * w_out, 9 * c)

    # Single MXU matmul, f32 accumulation; BN bias + ReLU in f32.
    acc = jnp.dot(lhs, w_ref[...], preferred_element_type=jnp.float32)   # (T*W_out, C_out)
    y = jnp.maximum(acc + b_ref[...], 0.0)
    o_ref[...] = y.reshape(t, w_out, y.shape[-1]).astype(o_ref.dtype)


def _pick_tile_oh(h_out, bytes_per_out_row, budget_bytes=2 * 1024 * 1024):
    """Largest divisor of h_out fitting a per-block VMEM budget; prefer >= 2 row tiles."""
    cap = max(1, budget_bytes // max(int(bytes_per_out_row), 1))
    divisors = [d for d in range(1, h_out + 1) if h_out % d == 0]
    fitting = [d for d in divisors if d <= cap]
    tile = max(fitting) if fitting else 1
    if tile == h_out and h_out > 1:            # keep the pipeline fed with several steps
        tile = max(d for d in divisors if d < h_out)
    return tile


def downsampling_layer(x_nchw, w_oihw, gamma, beta, mean, var, eps=1e-5):
    """x_nchw: (N, Cin, H, W) f32.  Returns (N, Cout, H_out, W_out) f32."""
    N, C, H, W = x_nchw.shape
    C_out = w_oihw.shape[0]
    H_out = (H - 1) // 2 + 1
    W_out = (W - 1) // 2 + 1

    # ---- fold BatchNorm (inference) into the conv weight / bias --------------------
    scale = gamma / jnp.sqrt(var + eps)                               # (C_out,)
    bias = (beta - mean * scale).reshape(1, C_out).astype(jnp.float32)
    w_hwio = jnp.transpose(w_oihw, (2, 3, 1, 0)) * scale              # (3,3,C,C_out)
    w_fold = w_hwio.reshape(9 * C, C_out).astype(jnp.bfloat16)

    # ---- NHWC, zero pad, even/odd column split, bf16 activations -------------------
    x = jnp.transpose(x_nchw, (0, 2, 3, 1))                           # (N, H, W, C)
    xpad = jnp.pad(x, ((0, 0), (1, 1), (1, 1), (0, 0))).astype(jnp.bfloat16)
    xe = xpad[:, :, 0::2, :]                                          # (N, H+2, We, C)
    xo = xpad[:, :, 1::2, :]                                          # (N, H+2, Wo, C)
    We, Wo = xe.shape[2], xo.shape[2]

    # ---- spatial row tiling ---------------------------------------------------------
    bytes_per_out_row = 2 * (2 * (We + Wo) * C * 2          # streamed input rows (dbl-buf)
                             + W_out * 9 * C * 2            # im2col slice
                             + W_out * C_out * 8)           # f32 acc + output
    tile_oh = _pick_tile_oh(H_out, bytes_per_out_row)
    num_tiles = H_out // tile_oh

    kernel = functools.partial(_down_kernel, tile_oh=tile_oh, w_out=W_out)

    out_nhwc = pl.pallas_call(
        kernel,
        out_shape=jax.ShapeDtypeStruct((N, H_out, W_out, C_out), x_nchw.dtype),
        grid_spec=pltpu.PrefetchScalarGridSpec(
            num_scalar_prefetch=0,
            grid=(N, num_tiles),
            in_specs=[
                # main row window: rows [2*tile_oh*t, 2*tile_oh*(t+1))  (block-aligned)
                pl.BlockSpec((None, 2 * tile_oh, We, C), lambda n, t: (n, t, 0, 0)),
                # 1-row bottom halo: padded row 2*tile_oh*(t+1)  (block size 1 -> element idx)
                pl.BlockSpec((None, 1, We, C),
                             lambda n, t: (n, 2 * tile_oh * (t + 1), 0, 0)),
                pl.BlockSpec((None, 2 * tile_oh, Wo, C), lambda n, t: (n, t, 0, 0)),
                pl.BlockSpec((None, 1, Wo, C),
                             lambda n, t: (n, 2 * tile_oh * (t + 1), 0, 0)),
                # weights / bias: constant index_map -> stay VMEM-resident across the grid
                pl.BlockSpec((9 * C, C_out), lambda n, t: (0, 0)),
                pl.BlockSpec((1, C_out), lambda n, t: (0, 0)),
            ],
            out_specs=pl.BlockSpec((None, tile_oh, W_out, C_out),
                                   lambda n, t: (n, t, 0, 0)),
        ),
        compiler_params=pltpu.CompilerParams(
            dimension_semantics=("parallel", "parallel"),
            vmem_limit_bytes=32 * 1024 * 1024,   # blocks are budgeted << this; safe on v5e/v6e/v7x
        ),
    )(xe, xe, xo, xo, w_fold, bias)

    return jnp.transpose(out_nhwc, (0, 3, 1, 2))                      # NCHW


def _ref_forward(x_nchw, w_oihw, gamma, beta, mean, var, eps=1e-5):
    """Pure-JAX f32 reference: conv(stride=2, pad=1) -> BN(inference) -> ReLU."""
    x = jnp.transpose(x_nchw, (0, 2, 3, 1))
    w_hwio = jnp.transpose(w_oihw, (2, 3, 1, 0))
    y = lax.conv_general_dilated(
        x, w_hwio, window_strides=(2, 2), padding=[(1, 1), (1, 1)],
        dimension_numbers=("NHWC", "HWIO", "NHWC"))
    scale = gamma / jnp.sqrt(var + eps)
    y = jnp.maximum(y * scale + (beta - mean * scale), 0.0)
    return jnp.transpose(y, (0, 3, 1, 2))


def _make_params(key, c_in, c_out):
    """Deterministic synthetic parameters in PyTorch shapes (OIHW conv, per-channel BN)."""
    ks = jax.random.split(key, 5)
    w = 0.3 * jax.random.normal(ks[0], (c_out, c_in, 3, 3), jnp.float32)
    gamma = jax.random.uniform(ks[1], (c_out,), jnp.float32, 0.5, 1.5)
    beta = 0.1 * jax.random.normal(ks[2], (c_out,), jnp.float32)
    mean = 0.1 * jax.random.normal(ks[3], (c_out,), jnp.float32)
    var = jax.random.uniform(ks[4], (c_out,), jnp.float32, 0.5, 1.5)
    return w, gamma, beta, mean, var


if __name__ == "__main__":
    N, C_in, H, W = 2, 4, 16, 16
    C_out = 8
    key = jax.random.PRNGKey(0)
    kx, kp = jax.random.split(key)
    x = jax.random.normal(kx, (N, C_in, H, W), jnp.float32)           # NCHW, like PyTorch
    w, gamma, beta, mean, var = _make_params(kp, C_in, C_out)

    out = jax.block_until_ready(downsampling_layer(x, w, gamma, beta, mean, var))
    ref = jax.block_until_ready(_ref_forward(x, w, gamma, beta, mean, var))

    H_out = (H - 1) // 2 + 1
    W_out = (W - 1) // 2 + 1
    assert out.shape == (N, C_out, H_out, W_out) and out.dtype == x.dtype
    # bf16 MXU operands vs f32 reference -> allow ~3e-2.
    assert jnp.allclose(out, ref, rtol=3e-2, atol=3e-2), "mismatch vs JAX reference"
    print("KERNEL_OK")
</pallas_src>

<mosaic_0001>
module attributes {stable_mosaic.version = 11 : i64} {
  func.func @_down_kernel(%arg0: i32, %arg1: i32, %arg2: memref<1x8x9x4xbf16, #tpu.memory_space<vmem>>, %arg3: memref<1x1x9x4xbf16, #tpu.memory_space<vmem>>, %arg4: memref<1x8x9x4xbf16, #tpu.memory_space<vmem>>, %arg5: memref<1x1x9x4xbf16, #tpu.memory_space<vmem>>, %arg6: memref<36x8xbf16, #tpu.memory_space<vmem>>, %arg7: memref<1x8xf32, #tpu.memory_space<vmem>>, %arg8: memref<1x4x8x8xf32, #tpu.memory_space<vmem>>) attributes {dimension_semantics = [#tpu.dimension_semantics<parallel>, #tpu.dimension_semantics<parallel>], iteration_bounds = array<i64: 2, 2>, scalar_prefetch = 0 : i64, scratch_operands = 0 : i64, tpu.core_type = #tpu.core_type<tc>, window_params = [{transform_indices = @transform_0, window_bounds = array<i64: 1, 8, 9, 4>}, {transform_indices = @transform_1, window_bounds = array<i64: 1, 1, 9, 4>}, {transform_indices = @transform_2, window_bounds = array<i64: 1, 8, 9, 4>}, {transform_indices = @transform_3, window_bounds = array<i64: 1, 1, 9, 4>}, {pipeline_mode = #tpu.pipeline_mode<synchronous>, transform_indices = @transform_4, window_bounds = array<i64: 36, 8>}, {pipeline_mode = #tpu.pipeline_mode<synchronous>, transform_indices = @transform_5, window_bounds = array<i64: 1, 8>}, {transform_indices = @transform_6, window_bounds = array<i64: 1, 4, 8, 8>}]} {
    %c0 = arith.constant 0 : index
    %c0_0 = arith.constant 0 : index
    %c0_1 = arith.constant 0 : index
    %c0_2 = arith.constant 0 : index
    %0 = vector.load %arg2[%c0, %c0_0, %c0_1, %c0_2] : memref<1x8x9x4xbf16, #tpu.memory_space<vmem>>, vector<1x8x9x4xbf16>
    %1 = vector.shape_cast %0 : vector<1x8x9x4xbf16> to vector<8x9x4xbf16>
    %c0_3 = arith.constant 0 : index
    %c0_4 = arith.constant 0 : index
    %c0_5 = arith.constant 0 : index
    %c0_6 = arith.constant 0 : index
    %2 = vector.load %arg4[%c0_3, %c0_4, %c0_5, %c0_6] : memref<1x8x9x4xbf16, #tpu.memory_space<vmem>>, vector<1x8x9x4xbf16>
    %3 = vector.shape_cast %2 : vector<1x8x9x4xbf16> to vector<8x9x4xbf16>
    %c0_7 = arith.constant 0 : index
    %c0_8 = arith.constant 0 : index
    %c0_9 = arith.constant 0 : index
    %c0_10 = arith.constant 0 : index
    %4 = vector.load %arg3[%c0_7, %c0_8, %c0_9, %c0_10] : memref<1x1x9x4xbf16, #tpu.memory_space<vmem>>, vector<1x1x9x4xbf16>
    %5 = vector.shape_cast %4 : vector<1x1x9x4xbf16> to vector<1x9x4xbf16>
    %c0_11 = arith.constant 0 : index
    %c0_12 = arith.constant 0 : index
    %c0_13 = arith.constant 0 : index
    %c0_14 = arith.constant 0 : index
    %6 = vector.load %arg5[%c0_11, %c0_12, %c0_13, %c0_14] : memref<1x1x9x4xbf16, #tpu.memory_space<vmem>>, vector<1x1x9x4xbf16>
    %7 = vector.shape_cast %6 : vector<1x1x9x4xbf16> to vector<1x9x4xbf16>
    %8 = vector.shape_cast %1 : vector<8x9x4xbf16> to vector<4x2x9x4xbf16>
    %9 = vector.shape_cast %3 : vector<8x9x4xbf16> to vector<4x2x9x4xbf16>
    %10 = vector.extract_strided_slice %8 {offsets = [1, 0, 0, 0], sizes = [3, 1, 9, 4], strides = [1, 1, 1, 1]} : vector<4x2x9x4xbf16> to vector<3x1x9x4xbf16>
    %11 = vector.shape_cast %10 : vector<3x1x9x4xbf16> to vector<3x9x4xbf16>
    %12 = tpu.concatenate %11, %5 in 0 : vector<3x9x4xbf16>, vector<1x9x4xbf16> -> vector<4x9x4xbf16>
    %13 = vector.extract_strided_slice %9 {offsets = [1, 0, 0, 0], sizes = [3, 1, 9, 4], strides = [1, 1, 1, 1]} : vector<4x2x9x4xbf16> to vector<3x1x9x4xbf16>
    %14 = vector.shape_cast %13 : vector<3x1x9x4xbf16> to vector<3x9x4xbf16>
    %15 = tpu.concatenate %14, %7 in 0 : vector<3x9x4xbf16>, vector<1x9x4xbf16> -> vector<4x9x4xbf16>
    %16 = vector.extract_strided_slice %8 {offsets = [0, 0, 0, 0], sizes = [4, 1, 9, 4], strides = [1, 1, 1, 1]} : vector<4x2x9x4xbf16> to vector<4x1x9x4xbf16>
    %17 = vector.shape_cast %16 : vector<4x1x9x4xbf16> to vector<4x9x4xbf16>
    %18 = vector.extract_strided_slice %8 {offsets = [0, 1, 0, 0], sizes = [4, 1, 9, 4], strides = [1, 1, 1, 1]} : vector<4x2x9x4xbf16> to vector<4x1x9x4xbf16>
    %19 = vector.shape_cast %18 : vector<4x1x9x4xbf16> to vector<4x9x4xbf16>
    %20 = vector.extract_strided_slice %9 {offsets = [0, 0, 0, 0], sizes = [4, 1, 9, 4], strides = [1, 1, 1, 1]} : vector<4x2x9x4xbf16> to vector<4x1x9x4xbf16>
    %21 = vector.shape_cast %20 : vector<4x1x9x4xbf16> to vector<4x9x4xbf16>
    %22 = vector.extract_strided_slice %9 {offsets = [0, 1, 0, 0], sizes = [4, 1, 9, 4], strides = [1, 1, 1, 1]} : vector<4x2x9x4xbf16> to vector<4x1x9x4xbf16>
    %23 = vector.shape_cast %22 : vector<4x1x9x4xbf16> to vector<4x9x4xbf16>
    %24 = vector.extract_strided_slice %17 {offsets = [0, 0, 0], sizes = [4, 8, 4], strides = [1, 1, 1]} : vector<4x9x4xbf16> to vector<4x8x4xbf16>
    %25 = vector.extract_strided_slice %21 {offsets = [0, 0, 0], sizes = [4, 8, 4], strides = [1, 1, 1]} : vector<4x9x4xbf16> to vector<4x8x4xbf16>
    %26 = vector.extract_strided_slice %17 {offsets = [0, 1, 0], sizes = [4, 8, 4], strides = [1, 1, 1]} : vector<4x9x4xbf16> to vector<4x8x4xbf16>
    %27 = vector.extract_strided_slice %19 {offsets = [0, 0, 0], sizes = [4, 8, 4], strides = [1, 1, 1]} : vector<4x9x4xbf16> to vector<4x8x4xbf16>
    %28 = vector.extract_strided_slice %23 {offsets = [0, 0, 0], sizes = [4, 8, 4], strides = [1, 1, 1]} : vector<4x9x4xbf16> to vector<4x8x4xbf16>
    %29 = vector.extract_strided_slice %19 {offsets = [0, 1, 0], sizes = [4, 8, 4], strides = [1, 1, 1]} : vector<4x9x4xbf16> to vector<4x8x4xbf16>
    %30 = vector.extract_strided_slice %12 {offsets = [0, 0, 0], sizes = [4, 8, 4], strides = [1, 1, 1]} : vector<4x9x4xbf16> to vector<4x8x4xbf16>
    %31 = vector.extract_strided_slice %15 {offsets = [0, 0, 0], sizes = [4, 8, 4], strides = [1, 1, 1]} : vector<4x9x4xbf16> to vector<4x8x4xbf16>
    %32 = vector.extract_strided_slice %12 {offsets = [0, 1, 0], sizes = [4, 8, 4], strides = [1, 1, 1]} : vector<4x9x4xbf16> to vector<4x8x4xbf16>
    %33 = tpu.concatenate %24, %25, %26, %27, %28, %29, %30, %31, %32 in 2 : vector<4x8x4xbf16>, vector<4x8x4xbf16>, vector<4x8x4xbf16>, vector<4x8x4xbf16>, vector<4x8x4xbf16>, vector<4x8x4xbf16>, vector<4x8x4xbf16>, vector<4x8x4xbf16>, vector<4x8x4xbf16> -> vector<4x8x36xbf16>
    %34 = vector.shape_cast %33 : vector<4x8x36xbf16> to vector<32x36xbf16>
    %c0_15 = arith.constant 0 : index
    %c0_16 = arith.constant 0 : index
    %35 = vector.load %arg6[%c0_15, %c0_16] : memref<36x8xbf16, #tpu.memory_space<vmem>>, vector<36x8xbf16>
    %cst = arith.constant dense<0.000000e+00> : vector<32x8xf32>
    %36 = tpu.matmul %34, %35, %cst {dimension_numbers = #tpu.dot_dimension_numbers<[1], [0], [0], [1], [0, 0, 1, 1], [], []>} : vector<32x36xbf16>, vector<36x8xbf16>, vector<32x8xf32> -> vector<32x8xf32>
    %c0_17 = arith.constant 0 : index
    %c0_18 = arith.constant 0 : index
    %37 = vector.load %arg7[%c0_17, %c0_18] : memref<1x8xf32, #tpu.memory_space<vmem>>, vector<1x8xf32>
    %38 = vector.broadcast %37 : vector<1x8xf32> to vector<32x8xf32>
    %39 = arith.addf %36, %38 : vector<32x8xf32>
    %cst_19 = arith.constant 0.000000e+00 : f32
    %40 = vector.broadcast %cst_19 : f32 to vector<32x8xf32>
    %41 = arith.maximumf %39, %40 : vector<32x8xf32>
    %42 = vector.shape_cast %41 : vector<32x8xf32> to vector<4x8x8xf32>
    %c0_20 = arith.constant 0 : index
    %c0_21 = arith.constant 0 : index
    %c0_22 = arith.constant 0 : index
    %c0_23 = arith.constant 0 : index
    %43 = vector.load %arg8[%c0_20, %c0_21, %c0_22, %c0_23] : memref<1x4x8x8xf32, #tpu.memory_space<vmem>>, vector<1x4x8x8xf32>
    %44 = vector.shape_cast %43 : vector<1x4x8x8xf32> to vector<4x8x8xf32>
    %45 = vector.shape_cast %42 : vector<4x8x8xf32> to vector<1x4x8x8xf32>
    tpu.vector_store %arg8[%c0_20, %c0_21, %c0_22, %c0_23], %45 {strides = array<i32>} : memref<1x4x8x8xf32, #tpu.memory_space<vmem>>, vector<1x4x8x8xf32>,
    return
  }
  func.func @transform_0(%arg0: i32, %arg1: i32) -> (i32, i32, i32, i32) {
    %c0_i32 = arith.constant 0 : i32
    %c0_i32_0 = arith.constant 0 : i32
    %c0_i32_1 = arith.constant 0 : i32
    return %arg0, %arg1, %c0_i32, %c0_i32_0 : i32, i32, i32, i32
  }
  func.func @transform_1(%arg0: i32, %arg1: i32) -> (i32, i32, i32, i32) {
    %c1_i32 = arith.constant 1 : i32
    %0 = arith.addi %arg1, %c1_i32 : i32
    %c8_i32 = arith.constant 8 : i32
    %1 = arith.muli %c8_i32, %0 : i32
    %c0_i32 = arith.constant 0 : i32
    %c0_i32_0 = arith.constant 0 : i32
    %c0_i32_1 = arith.constant 0 : i32
    return %arg0, %1, %c0_i32, %c0_i32_0 : i32, i32, i32, i32
  }
  func.func @transform_2(%arg0: i32, %arg1: i32) -> (i32, i32, i32, i32) {
    %c0_i32 = arith.constant 0 : i32
    %c0_i32_0 = arith.constant 0 : i32
    %c0_i32_1 = arith.constant 0 : i32
    return %arg0, %arg1, %c0_i32, %c0_i32_0 : i32, i32, i32, i32
  }
  func.func @transform_3(%arg0: i32, %arg1: i32) -> (i32, i32, i32, i32) {
    %c1_i32 = arith.constant 1 : i32
    %0 = arith.addi %arg1, %c1_i32 : i32
    %c8_i32 = arith.constant 8 : i32
    %1 = arith.muli %c8_i32, %0 : i32
    %c0_i32 = arith.constant 0 : i32
    %c0_i32_0 = arith.constant 0 : i32
    %c0_i32_1 = arith.constant 0 : i32
    return %arg0, %1, %c0_i32, %c0_i32_0 : i32, i32, i32, i32
  }
  func.func @transform_4(%arg0: i32, %arg1: i32) -> (i32, i32) {
    %c0_i32 = arith.constant 0 : i32
    %c0_i32_0 = arith.constant 0 : i32
    %c0_i32_1 = arith.constant 0 : i32
    return %c0_i32, %c0_i32_0 : i32, i32
  }
  func.func @transform_5(%arg0: i32, %arg1: i32) -> (i32, i32) {
    %c0_i32 = arith.constant 0 : i32
    %c0_i32_0 = arith.constant 0 : i32
    %c0_i32_1 = arith.constant 0 : i32
    return %c0_i32, %c0_i32_0 : i32, i32
  }
  func.func @transform_6(%arg0: i32, %arg1: i32) -> (i32, i32, i32, i32) {
    %c0_i32 = arith.constant 0 : i32
    %c0_i32_0 = arith.constant 0 : i32
    %c0_i32_1 = arith.constant 0 : i32
    return %arg0, %arg1, %c0_i32, %c0_i32_0 : i32, i32, i32, i32
  }
}

</mosaic_0001>

<llo_original>
// kernel: tpu_custom_call.1
$region0: #{tpu_custom_call.1}
  #allocation0 [shape = 'u32[]', space=smem, size = 0x4, offset = 0x4, fixed_abs, tag = 'smem constant byte address 0x4 - core index']
  #allocation1 [shape = 'u32[144,128]{1,0:T(1,128)}', space=vmem, size = 0x12000, scoped, tag = 'internal scratch']
  %s0 = inlined_call_operand.vmem [shape: bf16[2,18,9,4], index: 0, kind: input, shape index: {}]
  %s1 = inlined_call_operand.vmem [shape: bf16[2,18,9,4], index: 1, kind: input, shape index: {}]
  %s2 = inlined_call_operand.vmem [shape: bf16[2,18,9,4], index: 2, kind: input, shape index: {}]
  %s3 = inlined_call_operand.vmem [shape: bf16[2,18,9,4], index: 3, kind: input, shape index: {}]
  %s4 = inlined_call_operand.vmem [shape: bf16[36,8], index: 4, kind: input, shape index: {}]
  %s5 = inlined_call_operand.vmem [shape: f32[1,8], index: 5, kind: input, shape index: {}]
  %s6 = inlined_call_operand.hbm [shape: f32[2,8,8,8], index: 6, kind: output, shape index: {}]
  %s7 = sld [smem:[#allocation0]]
  $region57: #{tpu_custom_call.1} parent=0
    _
  %s9 = ssub.s32 1, %s7
  %s10 = scalar_select 0, %s9, %s7
  $region1: #{tpu_custom_call.1} parent=0
    #allocation2 [shape = 'u8[32768]{0}', space=vmem, size = 0x8000, scoped, tag = 'output window, operand 0']
    #allocation3 [shape = 's32[2]{0}', space=sflag, size = 0x8, scoped, tag = 'scoped memory for tpu_custom_call.1']
    %11 = vsyncpa [#allocation3], 0
    %s12 = scalar_lea.sflag [#allocation3], 1
    %13 = vsyncpa %s12, 0
    loop: start=0, step=1, limit=6
    $region2: #{tpu_custom_call.1} parent=1 // loop_pre_header
      _
    $region3: #{tpu_custom_call.1} parent=1 // loop_header
      %s15 = sphi 0, %s19
      %p16 = scmp.ge.s32.totalorder %s15, 6
      %s22 = sphi 0, %s34
      %s23 = sphi 0, %s30
      %s24 = sphi 0, %s22
      %s25 = sphi 0, %s23
      %s26 = sphi 0, %s24
      %s27 = sphi 0, %s25
      %s39 = sphi 0, %s41
      %s42 = sphi 0, %s39
      %s43 = sphi 0, %s42
      %s59 = sphi 0, %s43
      %s71 = sphi 0, %s73
      %s74 = sphi 0, %s71
      %s75 = sphi 0, %s74
      %s91 = sphi 0, %s75
      %s99 = sphi 0, %s101
      %s102 = sphi 0, %s99
      %s103 = sphi 0, %s102
      %s119 = sphi 0, %s103
      %s131 = sphi 0, %s133
      %s134 = sphi 0, %s131
      %s135 = sphi 0, %s134
      %s151 = sphi 0, %s135
      %s155 = sphi 0, %s155
      %s157 = sphi 0, %s155
      %s158 = sphi 0, %s157
      %s172 = sphi 0, %s158
      %s176 = sphi 0, %s176
      %s178 = sphi 0, %s176
      %s179 = sphi 0, %s178
      %s193 = sphi 0, %s179
      %s201 = sphi 0, %s203
      %s204 = sphi 0, %s201
      %s205 = sphi 0, %s204
      %s221 = sphi 0, %s205
    $region4: #{tpu_custom_call.1} parent=1 // loop_header_branch
      %18 = sbr.rel (%p16) target = $region8
    $region5: #{tpu_custom_call.1} parent=1 // loop_body
      %s20 = ssub.s32 %s15, 1
      %s21 = ssub.s32 %s15, 2
      %s28 = sadd.s32 1, %s23
      %p29 = scmp.ge.s32.totalorder %s28, 2
      %s30 = scalar_select %p29, 0, %s28
      %s31 = sadd.s32 1, %s22
      %s32 = scalar_select %p29, %s31, %s22
      %p33 = scmp.ge.s32.totalorder %s32, 2
      %s34 = scalar_select %p33, 0, %s32
      %s35 = ssub.s32 %s22, %s34
      %s36 = ssub.s32 %s23, %s30
      %s37 = sor.u32 %s35, %s36
      %p38 = scmp.eq.s32.totalorder %s37, 0
      %s40 = sadd.s32 %s39, 1
      %s41 = scalar_select %p38, %s39, %s40
      %p44 = pneg %p38
      %p45 = scmp.eq.s32.totalorder %s15, 3
      %p46 = por %p44, %p45
      %p47 = scmp.ne.s32.totalorder %s39, %s42
      %p48 = scmp.eq.s32.totalorder %s15, 0
      %p49 = por %p47, %p48
      %p50 = scmp.ne.s32.totalorder %s39, %s42
      %p51 = scmp.eq.s32.totalorder %s20, 3
      %p52 = por %p50, %p51
      %p53 = scmp.ne.s32.totalorder %s42, %s43
      %p54 = scmp.eq.s32.totalorder %s20, 0
      %p55 = por %p53, %p54
      %p56 = scmp.ne.s32.totalorder %s42, %s43
      %p57 = scmp.eq.s32.totalorder %s21, 3
      %p58 = por %p56, %p57
      %p60 = scmp.ne.s32.totalorder %s43, %s59
      %p61 = scmp.eq.s32.totalorder %s21, 0
      %p62 = por %p60, %p61
      %s63 = sadd.s32 %s23, 1
      %s64 = smul.u32 %s63, 8
      %s65 = sadd.s32 %s30, 1
      %s66 = smul.u32 %s65, 8
      %s67 = ssub.s32 %s22, %s34
      %s68 = ssub.s32 %s64, %s66
      %s69 = sor.u32 %s67, %s68
      %p70 = scmp.eq.s32.totalorder %s69, 0
      %s72 = sadd.s32 %s71, 1
      %s73 = scalar_select %p70, %s71, %s72
      %p76 = pneg %p70
      %p77 = scmp.eq.s32.totalorder %s15, 3
      %p78 = por %p76, %p77
      %p79 = scmp.ne.s32.totalorder %s71, %s74
      %p80 = scmp.eq.s32.totalorder %s15, 0
      %p81 = por %p79, %p80
      %p82 = scmp.ne.s32.totalorder %s71, %s74
      %p83 = scmp.eq.s32.totalorder %s20, 3
      %p84 = por %p82, %p83
      %p85 = scmp.ne.s32.totalorder %s74, %s75
      %p86 = scmp.eq.s32.totalorder %s20, 0
      %p87 = por %p85, %p86
      %p88 = scmp.ne.s32.totalorder %s74, %s75
      %p89 = scmp.eq.s32.totalorder %s21, 3
      %p90 = por %p88, %p89
      %p92 = scmp.ne.s32.totalorder %s75, %s91
      %p93 = scmp.eq.s32.totalorder %s21, 0
      %p94 = por %p92, %p93
      %s95 = ssub.s32 %s22, %s34
      %s96 = ssub.s32 %s23, %s30
      %s97 = sor.u32 %s95, %s96
      %p98 = scmp.eq.s32.totalorder %s97, 0
      %s100 = sadd.s32 %s99, 1
      %s101 = scalar_select %p98, %s99, %s100
      %p104 = pneg %p98
      %p105 = scmp.eq.s32.totalorder %s15, 3
      %p106 = por %p104, %p105
      %p107 = scmp.ne.s32.totalorder %s99, %s102
      %p108 = scmp.eq.s32.totalorder %s15, 0
      %p109 = por %p107, %p108
      %p110 = scmp.ne.s32.totalorder %s99, %s102
      %p111 = scmp.eq.s32.totalorder %s20, 3
      %p112 = por %p110, %p111
      %p113 = scmp.ne.s32.totalorder %s102, %s103
      %p114 = scmp.eq.s32.totalorder %s20, 0
      %p115 = por %p113, %p114
      %p116 = scmp.ne.s32.totalorder %s102, %s103
      %p117 = scmp.eq.s32.totalorder %s21, 3
      %p118 = por %p116, %p117
      %p120 = scmp.ne.s32.totalorder %s103, %s119
      %p121 = scmp.eq.s32.totalorder %s21, 0
      %p122 = por %p120, %p121
      %s123 = sadd.s32 %s23, 1
      %s124 = smul.u32 %s123, 8
      %s125 = sadd.s32 %s30, 1
      %s126 = smul.u32 %s125, 8
      %s127 = ssub.s32 %s22, %s34
      %s128 = ssub.s32 %s124, %s126
      %s129 = sor.u32 %s127, %s128
      %p130 = scmp.eq.s32.totalorder %s129, 0
      %s132 = sadd.s32 %s131, 1
      %s133 = scalar_select %p130, %s131, %s132
      %p136 = pneg %p130
      %p137 = scmp.eq.s32.totalorder %s15, 3
      %p138 = por %p136, %p137
      %p139 = scmp.ne.s32.totalorder %s131, %s134
      %p140 = scmp.eq.s32.totalorder %s15, 0
      %p141 = por %p139, %p140
      %p142 = scmp.ne.s32.totalorder %s131, %s134
      %p143 = scmp.eq.s32.totalorder %s20, 3
      %p144 = por %p142, %p143
      %p145 = scmp.ne.s32.totalorder %s134, %s135
      %p146 = scmp.eq.s32.totalorder %s20, 0
      %p147 = por %p145, %p146
      %p148 = scmp.ne.s32.totalorder %s134, %s135
      %p149 = scmp.eq.s32.totalorder %s21, 3
      %p150 = por %p148, %p149
      %p152 = scmp.ne.s32.totalorder %s135, %s151
      %p153 = scmp.eq.s32.totalorder %s21, 0
      %p154 = por %p152, %p153
      %s156 = sadd.s32 %s155, 1
      %p159 = scmp.eq.s32.totalorder %s15, 3
      %p160 = scmp.ne.s32.totalorder %s155, %s157
      %p161 = scmp.eq.s32.totalorder %s15, 0
      %p162 = por %p160, %p161
      %p163 = scmp.ne.s32.totalorder %s155, %s157
      %p164 = scmp.eq.s32.totalorder %s20, 3
      %p165 = por %p163, %p164
      %p166 = scmp.ne.s32.totalorder %s157, %s158
      %p167 = scmp.eq.s32.totalorder %s20, 0
      %p168 = por %p166, %p167
      %p169 = scmp.ne.s32.totalorder %s157, %s158
      %p170 = scmp.eq.s32.totalorder %s21, 3
      %p171 = por %p169, %p170
      %p173 = scmp.ne.s32.totalorder %s158, %s172
      %p174 = scmp.eq.s32.totalorder %s21, 0
      %p175 = por %p173, %p174
      %s177 = sadd.s32 %s176, 1
      %p180 = scmp.eq.s32.totalorder %s15, 3
      %p181 = scmp.ne.s32.totalorder %s176, %s178
      %p182 = scmp.eq.s32.totalorder %s15, 0
      %p183 = por %p181, %p182
      %p184 = scmp.ne.s32.totalorder %s176, %s178
      %p185 = scmp.eq.s32.totalorder %s20, 3
      %p186 = por %p184, %p185
      %p187 = scmp.ne.s32.totalorder %s178, %s179
      %p188 = scmp.eq.s32.totalorder %s20, 0
      %p189 = por %p187, %p188
      %p190 = scmp.ne.s32.totalorder %s178, %s179
      %p191 = scmp.eq.s32.totalorder %s21, 3
      %p192 = por %p190, %p191
      %p194 = scmp.ne.s32.totalorder %s179, %s193
      %p195 = scmp.eq.s32.totalorder %s21, 0
      %p196 = por %p194, %p195
      %s197 = ssub.s32 %s22, %s34
      %s198 = ssub.s32 %s23, %s30
      %s199 = sor.u32 %s197, %s198
      %p200 = scmp.eq.s32.totalorder %s199, 0
      %s202 = sadd.s32 %s201, 1
      %s203 = scalar_select %p200, %s201, %s202
      %p206 = pneg %p200
      %p207 = scmp.eq.s32.totalorder %s15, 3
      %p208 = por %p206, %p207
      %p209 = scmp.ne.s32.totalorder %s201, %s204
      %p210 = scmp.eq.s32.totalorder %s15, 0
      %p211 = por %p209, %p210
      %p212 = scmp.ne.s32.totalorder %s201, %s204
      %p213 = scmp.eq.s32.totalorder %s20, 3
      %p214 = por %p212, %p213
      %p215 = scmp.ne.s32.totalorder %s204, %s205
      %p216 = scmp.eq.s32.totalorder %s20, 0
      %p217 = por %p215, %p216
      %p218 = scmp.ne.s32.totalorder %s204, %s205
      %p219 = scmp.eq.s32.totalorder %s21, 3
      %p220 = por %p218, %p219
      %p222 = scmp.ne.s32.totalorder %s205, %s221
      %p223 = scmp.eq.s32.totalorder %s21, 0
      %p224 = por %p222, %p223
      %p225 = scmp.le.s32.totalorder 1, %s15
      %p226 = scmp.lt.s32.totalorder %s15, 5
      %p227 = pnand %p225, %p226
      %p228 = pneg %p227
      // Predicated region
      $region9: #{tpu_custom_call.1} parent=5 // pred_check
        _
      $region10: #{tpu_custom_call.1} parent=5 // pred_check_branch
        %230 = sbr.rel (%p227) target = $region12
      $region11: #{tpu_custom_call.1} parent=5 // pred_region
        %s231 = ssub.s32 %s15, 1
        // Predicated region
        $region13: #{tpu_custom_call.1} parent=11 // pred_check
          %p232 = pneg %p168
        $region14: #{tpu_custom_call.1} parent=11 // pred_check_branch
          %234 = sbr.rel (%p232) target = $region16
        $region15: #{tpu_custom_call.1} parent=11 // pred_region
          _
        $region16: #{tpu_custom_call.1} parent=11 // pred_fallthru
          _
        // Predicated region
        $region17: #{tpu_custom_call.1} parent=11 // pred_check
          %p235 = pneg %p189
        $region18: #{tpu_custom_call.1} parent=11 // pred_check_branch
          %237 = sbr.rel (%p235) target = $region20
        $region19: #{tpu_custom_call.1} parent=11 // pred_region
          _
        $region20: #{tpu_custom_call.1} parent=11 // pred_fallthru
          _
      $region12: #{tpu_custom_call.1} parent=5 // pred_fallthru
        _
      %p238 = scmp.lt.s32.totalorder %s15, 4
      // Predicated region
      $region21: #{tpu_custom_call.1} parent=5 // pred_check
        %p239 = pneg %p238
      $region22: #{tpu_custom_call.1} parent=5 // pred_check_branch
        %241 = sbr.rel (%p239) target = $region24
      $region23: #{tpu_custom_call.1} parent=5 // pred_region
        // Predicated region
        $region25: #{tpu_custom_call.1} parent=23 // pred_check
          %p242 = pneg %p49
        $region26: #{tpu_custom_call.1} parent=23 // pred_check_branch
          %244 = sbr.rel (%p242) target = $region28
        $region27: #{tpu_custom_call.1} parent=23 // pred_region
          %s245 = smul.u32 8, %s23
          %s246 = ssub.s32 18, %s245
          %p247 = scmp.lt.s32.totalorder %s246, 8
          %s248 = scalar_select %p247, %s246, 8
          %s249 = smul.u32 64, %s248
          %s250 = smul.u32 %s249, 2
          %p251 = scmp.lt.s32.totalorder %s22, 1
          %s252 = scalar_select %p251, %s22, 1
          %p253 = scmp.lt.s32.totalorder %s245, 17
          %s254 = scalar_select %p253, %s245, 17
          %s255 = smul.addr %s254, 2
          %s256 = smul.addr %s252, 36
          %s257 = sadd.s32 %s255, %s256
          %s258 = smul.addr %s257, 4
          %s259 = scalar_lea.vmem %s0, %s258
          %s260 = smul.u32 8, %s23
          %s261 = ssub.s32 18, %s260
          %p262 = scmp.lt.s32.totalorder %s261, 8
          %s263 = scalar_select %p262, %s261, 8
          %s264 = smul.u32 64, %s263
          %s265 = smul.u32 %s264, 2
        $region28: #{tpu_custom_call.1} parent=23 // pred_fallthru
          _
        // Predicated region
        $region29: #{tpu_custom_call.1} parent=23 // pred_check
          %p266 = pneg %p81
        $region30: #{tpu_custom_call.1} parent=23 // pred_check_branch
          %268 = sbr.rel (%p266) target = $region32
        $region31: #{tpu_custom_call.1} parent=23 // pred_region
          %s269 = sadd.s32 %s23, 1
          %s270 = smul.u32 %s269, 8
          %p271 = scmp.lt.s32.totalorder %s22, 1
          %s272 = scalar_select %p271, %s22, 1
          %p273 = scmp.lt.s32.totalorder %s270, 17
          %s274 = scalar_select %p273, %s270, 17
          %s275 = smul.addr %s274, 2
          %s276 = smul.addr %s272, 36
          %s277 = sadd.s32 %s275, %s276
          %s278 = smul.addr %s277, 4
          %s279 = scalar_lea.vmem %s1, %s278
          %s280 = sadd.s32 %s23, 1
          %s281 = smul.u32 %s280, 8
        $region32: #{tpu_custom_call.1} parent=23 // pred_fallthru
          _
        // Predicated region
        $region33: #{tpu_custom_call.1} parent=23 // pred_check
          %p282 = pneg %p109
        $region34: #{tpu_custom_call.1} parent=23 // pred_check_branch
          %284 = sbr.rel (%p282) target = $region36
        $region35: #{tpu_custom_call.1} parent=23 // pred_region
          %s285 = smul.u32 8, %s23
          %s286 = ssub.s32 18, %s285
          %p287 = scmp.lt.s32.totalorder %s286, 8
          %s288 = scalar_select %p287, %s286, 8
          %s289 = smul.u32 64, %s288
          %s290 = smul.u32 %s289, 2
          %p291 = scmp.lt.s32.totalorder %s22, 1
          %s292 = scalar_select %p291, %s22, 1
          %p293 = scmp.lt.s32.totalorder %s285, 17
          %s294 = scalar_select %p293, %s285, 17
          %s295 = smul.addr %s294, 2
          %s296 = smul.addr %s292, 36
          %s297 = sadd.s32 %s295, %s296
          %s298 = smul.addr %s297, 4
          %s299 = scalar_lea.vmem %s2, %s298
          %s300 = smul.u32 8, %s23
          %s301 = ssub.s32 18, %s300
          %p302 = scmp.lt.s32.totalorder %s301, 8
          %s303 = scalar_select %p302, %s301, 8
          %s304 = smul.u32 64, %s303
          %s305 = smul.u32 %s304, 2
        $region36: #{tpu_custom_call.1} parent=23 // pred_fallthru
          _
        // Predicated region
        $region37: #{tpu_custom_call.1} parent=23 // pred_check
          %p306 = pneg %p141
        $region38: #{tpu_custom_call.1} parent=23 // pred_check_branch
          %308 = sbr.rel (%p306) target = $region40
        $region39: #{tpu_custom_call.1} parent=23 // pred_region
          %s309 = sadd.s32 %s23, 1
          %s310 = smul.u32 %s309, 8
          %p311 = scmp.lt.s32.totalorder %s22, 1
          %s312 = scalar_select %p311, %s22, 1
          %p313 = scmp.lt.s32.totalorder %s310, 17
          %s314 = scalar_select %p313, %s310, 17
          %s315 = smul.addr %s314, 2
          %s316 = smul.addr %s312, 36
          %s317 = sadd.s32 %s315, %s316
          %s318 = smul.addr %s317, 4
          %s319 = scalar_lea.vmem %s3, %s318
          %s320 = sadd.s32 %s23, 1
          %s321 = smul.u32 %s320, 8
        $region40: #{tpu_custom_call.1} parent=23 // pred_fallthru
          _
      $region24: #{tpu_custom_call.1} parent=5 // pred_fallthru
        _
      %p322 = scmp.le.s32.totalorder 1, %s15
      %p323 = scmp.lt.s32.totalorder %s15, 5
      %p324 = pnand %p322, %p323
      %p325 = pneg %p324
      // Predicated region
      $region41: #{tpu_custom_call.1} parent=5 // pred_check
        _
      $region42: #{tpu_custom_call.1} parent=5 // pred_check_branch
        %327 = sbr.rel (%p324) target = $region44
      $region43: #{tpu_custom_call.1} parent=5 // pred_region
        %s328 = ssub.s32 %s15, 1
        %s329 = smul.u32 8, %s25
        %s330 = ssub.s32 18, %s329
        %p331 = scmp.lt.s32.totalorder %s330, 8
        %s332 = scalar_select %p331, %s330, 8
        %s333 = smul.u32 64, %s332
        %s334 = smul.u32 %s333, 2
        %p335 = scmp.lt.s32.totalorder %s24, 1
        %s336 = scalar_select %p335, %s24, 1
        %p337 = scmp.lt.s32.totalorder %s329, 17
        %s338 = scalar_select %p337, %s329, 17
        %s339 = smul.addr %s338, 2
        %s340 = smul.addr %s336, 36
        %s341 = sadd.s32 %s339, %s340
        %s342 = smul.addr %s341, 4
        %s343 = scalar_lea.vmem %s0, %s342
        %p344 = pneg %p55
        %p345 = pneg %p52
        %s346 = sadd.s32 %s25, 1
        %s347 = smul.u32 %s346, 8
        %p348 = scmp.lt.s32.totalorder %s24, 1
        %s349 = scalar_select %p348, %s24, 1
        %p350 = scmp.lt.s32.totalorder %s347, 17
        %s351 = scalar_select %p350, %s347, 17
        %s352 = smul.addr %s351, 2
        %s353 = smul.addr %s349, 36
        %s354 = sadd.s32 %s352, %s353
        %s355 = smul.addr %s354, 4
        %s356 = scalar_lea.vmem %s1, %s355
        %p357 = pneg %p87
        %p358 = pneg %p84
        %s359 = smul.u32 8, %s25
        %s360 = ssub.s32 18, %s359
        %p361 = scmp.lt.s32.totalorder %s360, 8
        %s362 = scalar_select %p361, %s360, 8
        %s363 = smul.u32 64, %s362
        %s364 = smul.u32 %s363, 2
        %p365 = scmp.lt.s32.totalorder %s24, 1
        %s366 = scalar_select %p365, %s24, 1
        %p367 = scmp.lt.s32.totalorder %s359, 17
        %s368 = scalar_select %p367, %s359, 17
        %s369 = smul.addr %s368, 2
        %s370 = smul.addr %s366, 36
        %s371 = sadd.s32 %s369, %s370
        %s372 = smul.addr %s371, 4
        %s373 = scalar_lea.vmem %s2, %s372
        %p374 = pneg %p115
        %p375 = pneg %p112
        %s376 = sadd.s32 %s25, 1
        %s377 = smul.u32 %s376, 8
        %p378 = scmp.lt.s32.totalorder %s24, 1
        %s379 = scalar_select %p378, %s24, 1
        %p380 = scmp.lt.s32.totalorder %s377, 17
        %s381 = scalar_select %p380, %s377, 17
        %s382 = smul.addr %s381, 2
        %s383 = smul.addr %s379, 36
        %s384 = sadd.s32 %s382, %s383
        %s385 = smul.addr %s384, 4
        %s386 = scalar_lea.vmem %s3, %s385
        %p387 = pneg %p147
        %p388 = pneg %p144
        %p389 = pneg %p168
        %p390 = pneg %p165
        %p391 = pneg %p189
        %p392 = pneg %p186
        %p393 = pneg %p217
        %p394 = pneg %p214
        %s395 = sand.u32 %s204, 1
        %s396 = scalar_lea.sflag [#allocation3], %s395
        %s397 = sand.u32 %s204, 1
        %s398 = smul.addr %s397, 32
        %s399 = scalar_lea.vmem [#allocation2], %s398
        %s400 = smul.u32 8, %s25
        %s401 = ssub.s32 18, %s400
        %p402 = scmp.lt.s32.totalorder %s401, 8
        %s403 = scalar_select %p402, %s401, 8
        %s404 = smul.u32 64, %s403
        %s405 = smul.u32 %s404, 2
        %p406 = scmp.lt.s32.totalorder %s24, 1
        %s407 = scalar_select %p406, %s24, 1
        %p408 = scmp.lt.s32.totalorder %s400, 17
        %s409 = scalar_select %p408, %s400, 17
        %s410 = smul.addr %s409, 2
        %s411 = smul.addr %s407, 36
        %s412 = sadd.s32 %s410, %s411
        %s413 = smul.addr %s412, 4
        %s414 = scalar_lea.vmem %s0, %s413
        %s415 = smul.u32 8, %s25
        %s416 = ssub.s32 18, %s415
        %p417 = scmp.lt.s32.totalorder %s416, 8
        %s418 = scalar_select %p417, %s416, 8
        %s419 = smul.u32 64, %s418
        %s420 = smul.u32 %s419, 2
        %s421 = sadd.s32 %s25, 1
        %s422 = smul.u32 %s421, 8
        %p423 = scmp.lt.s32.totalorder %s24, 1
        %s424 = scalar_select %p423, %s24, 1
        %p425 = scmp.lt.s32.totalorder %s422, 17
        %s426 = scalar_select %p425, %s422, 17
        %s427 = smul.addr %s426, 2
        %s428 = smul.addr %s424, 36
        %s429 = sadd.s32 %s427, %s428
        %s430 = smul.addr %s429, 4
        %s431 = scalar_lea.vmem %s1, %s430
        %s432 = sadd.s32 %s25, 1
        %s433 = smul.u32 %s432, 8
        %s434 = smul.u32 8, %s25
        %s435 = ssub.s32 18, %s434
        %p436 = scmp.lt.s32.totalorder %s435, 8
        %s437 = scalar_select %p436, %s435, 8
        %s438 = smul.u32 64, %s437
        %s439 = smul.u32 %s438, 2
        %p440 = scmp.lt.s32.totalorder %s24, 1
        %s441 = scalar_select %p440, %s24, 1
        %p442 = scmp.lt.s32.totalorder %s434, 17
        %s443 = scalar_select %p442, %s434, 17
        %s444 = smul.addr %s443, 2
        %s445 = smul.addr %s441, 36
        %s446 = sadd.s32 %s444, %s445
        %s447 = smul.addr %s446, 4
        %s448 = scalar_lea.vmem %s2, %s447
        %s449 = smul.u32 8, %s25
        %s450 = ssub.s32 18, %s449
        %p451 = scmp.lt.s32.totalorder %s450, 8
        %s452 = scalar_select %p451, %s450, 8
        %s453 = smul.u32 64, %s452
        %s454 = smul.u32 %s453, 2
        %s455 = sadd.s32 %s25, 1
        %s456 = smul.u32 %s455, 8
        %p457 = scmp.lt.s32.totalorder %s24, 1
        %s458 = scalar_select %p457, %s24, 1
        %p459 = scmp.lt.s32.totalorder %s456, 17
        %s460 = scalar_select %p459, %s456, 17
        %s461 = smul.addr %s460, 2
        %s462 = smul.addr %s458, 36
        %s463 = sadd.s32 %s461, %s462
        %s464 = smul.addr %s463, 4
        %s465 = scalar_lea.vmem %s3, %s464
        %s466 = sadd.s32 %s25, 1
        %s467 = smul.u32 %s466, 8
        %s468 = smul.u32 4, %s25
        %v470 = vld [vmem:[%s414] sm:$0xf]
        %v471 = vld [vmem:[%s414 + $0x4] sm:$0x1]
        %v472 = vld [vmem:[%s414 + $0x8] sm:$0xf]
        %v473 = vld [vmem:[%s414 + $0xc] sm:$0x1]
        %v474 = vld [vmem:[%s414 + $0x10] sm:$0xf]
        %v475 = vld [vmem:[%s414 + $0x14] sm:$0x1]
        %v476 = vld [vmem:[%s414 + $0x18] sm:$0xf]
        %v477 = vld [vmem:[%s414 + $0x1c] sm:$0x1]
        %v478 = vld [vmem:[%s414 + $0x20] sm:$0xf]
        %v479 = vld [vmem:[%s414 + $0x24] sm:$0x1]
        %v480 = vld [vmem:[%s414 + $0x28] sm:$0xf]
        %v481 = vld [vmem:[%s414 + $0x2c] sm:$0x1]
        %v482 = vld [vmem:[%s414 + $0x30] sm:$0xf]
        %v483 = vld [vmem:[%s414 + $0x34] sm:$0x1]
        %v484 = vld [vmem:[%s414 + $0x38] sm:$0xf]
        %v485 = vld [vmem:[%s414 + $0x3c] sm:$0x1]
        %v486 = vld [vmem:[%s448] sm:$0xf]
        %v487 = vld [vmem:[%s448 + $0x8] sm:$0xf]
        %v488 = vld [vmem:[%s448 + $0x10] sm:$0xf]
        %v489 = vld [vmem:[%s448 + $0x18] sm:$0xf]
        %v490 = vld [vmem:[%s448 + $0x20] sm:$0xf]
        %v491 = vld [vmem:[%s448 + $0x28] sm:$0xf]
        %v492 = vld [vmem:[%s448 + $0x30] sm:$0xf]
        %v493 = vld [vmem:[%s448 + $0x38] sm:$0xf]
        %v494 = vld [vmem:[%s431] sm:$0xf]
        %v495 = vld [vmem:[%s431 + $0x4] sm:$0x1]
        %v496 = vld [vmem:[%s465] sm:$0xf]
        %v501 = vunpack.c.l.b16 %v486
        %v502 = vunpack.c.l.b16 %v488
        %v503 = vunpack.c.l.b16 %v490
        %v504 = vunpack.c.l.b16 %v492
        %v505 = vpack.c.b16 %v501, %v501
        %v506 = vpack.c.b16 %v502, %v502
        %v507 = vpack.c.b16 %v503, %v503
        %v508 = vpack.c.b16 %v504, %v504
        %509 = vrot.lane.b32.xlu0 %v505, 4
        %v510 = vpop.permute.xlu0 %509
        %511 = vrot.lane.b32.xlu0 %v506, 4
        %v512 = vpop.permute.xlu0 %511
        %513 = vrot.lane.b32.xlu0 %v507, 4
        %v514 = vpop.permute.xlu0 %513
        %515 = vrot.lane.b32.xlu0 %v508, 4
        %v516 = vpop.permute.xlu0 %515
        %v525 = vunpack.c.l.b16 %v470
        %v526 = vunpack.c.l.b16 %v471
        %v527 = vunpack.c.l.b16 %v474
        %v528 = vunpack.c.l.b16 %v475
        %v529 = vunpack.c.l.b16 %v478
        %v530 = vunpack.c.l.b16 %v479
        %v531 = vunpack.c.l.b16 %v482
        %v532 = vunpack.c.l.b16 %v483
        %v533 = vpack.c.b16 %v526, %v525
        %v534 = vpack.c.b16 %v528, %v527
        %v535 = vpack.c.b16 %v530, %v529
        %v536 = vpack.c.b16 %v532, %v531
        %v538 = vshrl.u32 %v533, 16
        %v540 = vshll.u32 %v533, 16
        %v542 = vrot.slane %v540, 1
        %v543 = vor.u32 %v538, %v542
        %v545 = vshrl.u32 %v534, 16
        %v547 = vshll.u32 %v534, 16
        %v549 = vrot.slane %v547, 1
        %v550 = vor.u32 %v545, %v549
        %v552 = vshrl.u32 %v535, 16
        %v554 = vshll.u32 %v535, 16
        %v556 = vrot.slane %v554, 1
        %v557 = vor.u32 %v552, %v556
        %v559 = vshrl.u32 %v536, 16
        %v561 = vshll.u32 %v536, 16
        %v563 = vrot.slane %v561, 1
        %v564 = vor.u32 %v559, %v563
        %565 = vrot.lane.b32.xlu0 %v543, 8
        %v566 = vpop.permute.xlu0 %565
        %567 = vrot.lane.b32.xlu0 %v550, 8
        %v568 = vpop.permute.xlu0 %567
        %569 = vrot.lane.b32.xlu0 %v557, 8
        %v570 = vpop.permute.xlu0 %569
        %571 = vrot.lane.b32.xlu0 %v564, 8
        %v572 = vpop.permute.xlu0 %571
        %v577 = vunpack.c.l.b16 %v472
        %v578 = vunpack.c.l.b16 %v476
        %v579 = vunpack.c.l.b16 %v480
        %v580 = vunpack.c.l.b16 %v484
        %v581 = vpack.c.b16 %v577, %v577
        %v582 = vpack.c.b16 %v578, %v578
        %v583 = vpack.c.b16 %v579, %v579
        %v584 = vpack.c.b16 %v580, %v580
        %585 = vrot.lane.b32.xlu0 %v581, 12
        %v586 = vpop.permute.xlu0 %585
        %587 = vrot.lane.b32.xlu0 %v582, 12
        %v588 = vpop.permute.xlu0 %587
        %589 = vrot.lane.b32.xlu0 %v583, 12
        %v590 = vpop.permute.xlu0 %589
        %591 = vrot.lane.b32.xlu0 %v584, 12
        %v592 = vpop.permute.xlu0 %591
        %v597 = vunpack.c.l.b16 %v487
        %v598 = vunpack.c.l.b16 %v489
        %v599 = vunpack.c.l.b16 %v491
        %v600 = vunpack.c.l.b16 %v493
        %v601 = vpack.c.b16 %v597, %v597
        %v602 = vpack.c.b16 %v598, %v598
        %v603 = vpack.c.b16 %v599, %v599
        %v604 = vpack.c.b16 %v600, %v600
        %605 = vrot.lane.b32.xlu0 %v601, 16
        %v606 = vpop.permute.xlu0 %605
        %607 = vrot.lane.b32.xlu0 %v602, 16
        %v608 = vpop.permute.xlu0 %607
        %609 = vrot.lane.b32.xlu0 %v603, 16
        %v610 = vpop.permute.xlu0 %609
        %611 = vrot.lane.b32.xlu0 %v604, 16
        %v612 = vpop.permute.xlu0 %611
        %v617 = vunpack.c.l.b16 %v473
        %v618 = vunpack.c.l.b16 %v477
        %v619 = vunpack.c.l.b16 %v481
        %v620 = vunpack.c.l.b16 %v485
        %v621 = vpack.c.b16 %v617, %v577
        %v622 = vpack.c.b16 %v618, %v578
        %v623 = vpack.c.b16 %v619, %v579
        %v624 = vpack.c.b16 %v620, %v580
        %v626 = vshrl.u32 %v621, 16
        %v628 = vshll.u32 %v621, 16
        %v630 = vrot.slane %v628, 1
        %v631 = vor.u32 %v626, %v630
        %v633 = vshrl.u32 %v622, 16
        %v635 = vshll.u32 %v622, 16
        %v637 = vrot.slane %v635, 1
        %v638 = vor.u32 %v633, %v637
        %v640 = vshrl.u32 %v623, 16
        %v642 = vshll.u32 %v623, 16
        %v644 = vrot.slane %v642, 1
        %v645 = vor.u32 %v640, %v644
        %v647 = vshrl.u32 %v624, 16
        %v649 = vshll.u32 %v624, 16
        %v651 = vrot.slane %v649, 1
        %v652 = vor.u32 %v647, %v651
        %653 = vrot.lane.b32.xlu0 %v631, 20
        %v654 = vpop.permute.xlu0 %653
        %655 = vrot.lane.b32.xlu0 %v638, 20
        %v656 = vpop.permute.xlu0 %655
        %657 = vrot.lane.b32.xlu0 %v645, 20
        %v658 = vpop.permute.xlu0 %657
        %659 = vrot.lane.b32.xlu0 %v652, 20
        %v660 = vpop.permute.xlu0 %659
        %v662 = vunpack.c.l.b16 %v494
        %v663 = vpack.c.b16 %v527, %v527
        %v664 = vpack.c.b16 %v529, %v529
        %v665 = vpack.c.b16 %v531, %v531
        %v666 = vpack.c.b16 %v662, %v662
        %667 = vrot.lane.b32.xlu0 %v663, 24
        %v668 = vpop.permute.xlu0 %667
        %669 = vrot.lane.b32.xlu0 %v664, 24
        %v670 = vpop.permute.xlu0 %669
        %671 = vrot.lane.b32.xlu0 %v665, 24
        %v672 = vpop.permute.xlu0 %671
        %673 = vrot.lane.b32.xlu0 %v666, 24
        %v674 = vpop.permute.xlu0 %673
        %v676 = vunpack.c.l.b16 %v496
        %v677 = vpack.c.b16 %v676, %v676
        %678 = vrot.lane.b32.xlu0 %v506, 28
        %v679 = vpop.permute.xlu0 %678
        %680 = vrot.lane.b32.xlu0 %v507, 28
        %v681 = vpop.permute.xlu0 %680
        %682 = vrot.lane.b32.xlu0 %v508, 28
        %v683 = vpop.permute.xlu0 %682
        %684 = vrot.lane.b32.xlu0 %v677, 28
        %v685 = vpop.permute.xlu0 %684
        %v687 = vunpack.c.l.b16 %v495
        %v688 = vpack.c.b16 %v687, %v662
        %v690 = vshrl.u32 %v688, 16
        %v692 = vshll.u32 %v688, 16
        %v694 = vrot.slane %v692, 1
        %v695 = vor.u32 %v690, %v694
        %696 = vrot.lane.b32.xlu0 %v550, 32
        %v697 = vpop.permute.xlu0 %696
        %698 = vrot.lane.b32.xlu0 %v557, 32
        %v699 = vpop.permute.xlu0 %698
        %700 = vrot.lane.b32.xlu0 %v564, 32
        %v701 = vpop.permute.xlu0 %700
        %702 = vrot.lane.b32.xlu0 %v695, 32
        %v703 = vpop.permute.xlu0 %702
        %vm704 = vcmask 31744
        %v707 = vsel %vm704, %v470, %v510
        %v710 = vsel %vm704, %v474, %v512
        %v713 = vsel %vm704, %v478, %v514
        %v716 = vsel %vm704, %v482, %v516
        %vm717 = vcmask 64512
        %v719 = vsel %vm717, %v707, %v566
        %v721 = vsel %vm717, %v710, %v568
        %v723 = vsel %vm717, %v713, %v570
        %v725 = vsel %vm717, %v716, %v572
        %vm726 = vcmask 97280
        %v728 = vsel %vm726, %v719, %v586
        %v730 = vsel %vm726, %v721, %v588
        %v732 = vsel %vm726, %v723, %v590
        %v734 = vsel %vm726, %v725, %v592
        %vm735 = vcmask 130048
        %v737 = vsel %vm735, %v728, %v606
        %v739 = vsel %vm735, %v730, %v608
        %v741 = vsel %vm735, %v732, %v610
        %v743 = vsel %vm735, %v734, %v612
        %vm744 = vcmask 162816
        %v746 = vsel %vm744, %v737, %v654
        %v748 = vsel %vm744, %v739, %v656
        %v750 = vsel %vm744, %v741, %v658
        %v752 = vsel %vm744, %v743, %v660
        %vm753 = vcmask 195584
        %v755 = vsel %vm753, %v746, %v668
        %v757 = vsel %vm753, %v748, %v670
        %v759 = vsel %vm753, %v750, %v672
        %v761 = vsel %vm753, %v752, %v674
        %vm762 = vcmask 228352
        %v764 = vsel %vm762, %v755, %v679
        %v766 = vsel %vm762, %v757, %v681
        %v768 = vsel %vm762, %v759, %v683
        %v770 = vsel %vm762, %v761, %v685
        %vm771 = vcmask 261120
        %v773 = vsel %vm771, %v764, %v697
        %v775 = vsel %vm771, %v766, %v699
        %v777 = vsel %vm771, %v768, %v701
        %v779 = vsel %vm771, %v770, %v703
        %v780 = vld [vmem:[%s4] sm:$0xf]
        %v781 = vld [vmem:[%s4 + $0x4] sm:$0xf]
        %v782 = vld [vmem:[%s4 + $0x8] sm:$0xf]
        %v783 = vld [vmem:[%s4 + $0xc] sm:$0xf]
        %v784 = vld [vmem:[%s4 + $0x10] sm:$0x3]
        %v785 = vld [vmem:[%s5] sm:$0x1]
        %v787 = vlaneseq
        %v788 = vshrl.u32 %v787, 7
        %v789 = vsub.s32 0, %v788
        %v790 = vrot.slane %v785, %v789
        %v796 = vunpack.c.l.b16 %v773
        %v797 = vunpack.c.l.b16 %v775
        %v798 = vunpack.c.l.b16 %v777
        %v799 = vunpack.c.l.b16 %v779
        %v800 = vpack.c.b16 %v797, %v796
        %v801 = vpack.c.b16 %v799, %v798
        %v807 = vunpack.c.l.b16 %v780
        %v808 = vunpack.c.l.b16 %v781
        %v809 = vunpack.c.l.b16 %v782
        %v810 = vunpack.c.l.b16 %v783
        %v811 = vunpack.c.l.b16 %v784
        %v812 = vpack.c.b16 %v808, %v807
        %v813 = vpack.c.b16 %v810, %v809
        %v814 = vpack.c.b16 %v811, %v811
        %vm817 = vcmask 293888
        %v819 = vsel %vm817, %v800, 0
        %v822 = vsel %vm817, %v801, 0
        %vm824 = vcmask 1041408
        %v826 = vsel %vm824, %v814, 0
        %828 = vmatprep.subr.bf16.mxu0 0
        %829 = vmatpush1.bf16.msra.mxu0 %v812
        %830 = vmatprep.subr.bf16.mxu0 0
        %831 = vmatpush1.bf16.msra.mxu0 %v813
        %832 = vmatprep.subr.bf16.mxu0 0
        %833 = vmatpush1.bf16.msra.mxu0 %v826
        %834 = vmatprep.subr.bf16.mxu0 0
        %835 = vmatpush1.bf16.msra.mxu0 0
        %836 = vmatprep.subr.bf16.mxu0 0
        %837 = vmatpush1.bf16.msra.mxu0 0
        %838 = vmatprep.subr.bf16.mxu0 0
        %839 = vmatpush1.bf16.msra.mxu0 0
        %840 = vmatprep.subr.bf16.mxu0 0
        %841 = vmatpush1.bf16.msra.mxu0 0
        %842 = vmatprep.subr.bf16.mxu0 0
        %843 = vmatpush1.bf16.msra.mxu0 0
        %844 = vmatprep.subr.bf16.mxu0 0
        %845 = vmatpush1.bf16.msra.mxu0 0
        %846 = vmatprep.subr.bf16.mxu0 0
        %847 = vmatpush1.bf16.msra.mxu0 0
        %848 = vmatprep.subr.bf16.mxu0 0
        %849 = vmatpush1.bf16.msra.mxu0 0
        %850 = vmatprep.subr.bf16.mxu0 0
        %851 = vmatpush1.bf16.msra.mxu0 0
        %852 = vmatprep.subr.bf16.mxu0 0
        %853 = vmatpush1.bf16.msra.mxu0 0
        %854 = vmatprep.subr.bf16.mxu0 0
        %855 = vmatpush1.bf16.msra.mxu0 0
        %856 = vmatprep.subr.bf16.mxu0 0
        %857 = vmatpush1.bf16.msra.mxu0 0
        %858 = vmatprep.subr.bf16.mxu0 0
        %859 = vmatpush1.bf16.msra.mxu0 0
        %860 = vmatprep.mubr.bf16.mxu0 0
        %861 = vmatmul.mubr.bf16.gmra.mrb[0].mxu0 %v819
        %v862 = vpop.f32.mrb[0].mxu0
        %v863 = vadd.f32 %v790, %v862
        %v864 = vpop.f32.mrb[0].mxu0
        %v865 = vpop.f32.mrb[0].mxu0
        %v866 = vadd.f32 %v790, %v865
        %v867 = vpop.f32.mrb[0].mxu0
        %868 = vmatprep.mubr.bf16.mxu0 0
        %869 = vmatmul.mubr.bf16.gmra.mrb[0].mxu0 %v822
        %v870 = vpop.f32.mrb[0].mxu0
        %v871 = vadd.f32 %v790, %v870
        %v872 = vpop.f32.mrb[0].mxu0
        %v873 = vpop.f32.mrb[0].mxu0
        %v874 = vadd.f32 %v790, %v873
        %v875 = vpop.f32.mrb[0].mxu0
        %876 = vdwg.mxu0
        %v877 = vmax.f32 %v863, 0.0
        %v878 = vmax.f32 %v866, 0.0
        %v879 = vmax.f32 %v871, 0.0
        %v880 = vmax.f32 %v874, 0.0
        %881 = vst.msk [vmem:[%s399] sm:$0xff] %vm717, %v877
        %882 = vst.msk [vmem:[%s399 + $0x8] sm:$0xff] %vm717, %v878
        %883 = vst.msk [vmem:[%s399 + $0x10] sm:$0xff] %vm717, %v879
        %884 = vst.msk [vmem:[%s399 + $0x18] sm:$0xff] %vm717, %v880
        %s885 = sand.u32 %s204, 1
        %s886 = scalar_lea.sflag [#allocation3], %s885
        %s887 = sand.u32 %s204, 1
        %s888 = smul.addr %s887, 32
        %s889 = scalar_lea.vmem [#allocation2], %s888
        // Predicated region
        $region45: #{tpu_custom_call.1} parent=43 // pred_check
          %p890 = pneg %p214
        $region46: #{tpu_custom_call.1} parent=43 // pred_check_branch
          %892 = sbr.rel (%p890) target = $region48
        $region47: #{tpu_custom_call.1} parent=43 // pred_region
          %s893 = smul.u32 4, %s25
          %s895 = ssub.s32 512, 512
          %896 = vsyncadd %s886, %s895
          %s897 = smul.addr %s24, 8
          %s898 = sadd.s32 %s893, %s897
          %s899 = smul.addr %s898, 128
          %s900 = scalar_lea.hbm %s6, %s899
          %s901 = sshll.u32 %s889, 4
          %s902 = int_to_ptr.vmem [resolvable:$true] %s901
          %907 = dma.vmem_to_hbm [thread:$0]  %s902, 512, %s900, %s886, 128, 128, 8
        $region48: #{tpu_custom_call.1} parent=43 // pred_fallthru
          _
      $region44: #{tpu_custom_call.1} parent=5 // pred_fallthru
        _
      %p908 = scmp.le.s32.totalorder 2, %s15
      // Predicated region
      $region49: #{tpu_custom_call.1} parent=5 // pred_check
        %p909 = pneg %p908
      $region50: #{tpu_custom_call.1} parent=5 // pred_check_branch
        %911 = sbr.rel (%p909) target = $region52
      $region51: #{tpu_custom_call.1} parent=5 // pred_region
        %s912 = ssub.s32 %s15, 2
        // Predicated region
        $region53: #{tpu_custom_call.1} parent=51 // pred_check
          %p913 = pneg %p220
        $region54: #{tpu_custom_call.1} parent=51 // pred_check_branch
          %915 = sbr.rel (%p913) target = $region56
        $region55: #{tpu_custom_call.1} parent=51 // pred_region
          %s916 = sand.u32 %s205, 1
          %s917 = scalar_lea.sflag [#allocation3], %s916
          %s918 = sand.u32 %s205, 1
          %s919 = smul.addr %s918, 32
          %s920 = scalar_lea.vmem [#allocation2], %s919
          %921 = dma.done %s917, 512
        $region56: #{tpu_custom_call.1} parent=51 // pred_fallthru
          _
      $region52: #{tpu_custom_call.1} parent=5 // pred_fallthru
        _
    $region6: #{tpu_custom_call.1} parent=1 // loop_footer
      %s19 = sadd.s32 1, %s15
    $region7: #{tpu_custom_call.1} parent=1 // loop_footer_branch
      %14 = sbr.rel target = $region3
    $region8: #{tpu_custom_call.1} parent=1 // loop_exit
      _
    %922 = vsyncpa [#allocation3], 1
    %s923 = scalar_lea.sflag [#allocation3], 1
    %924 = vsyncpa %s923, 1

</llo_original>
